<compile_context>
chip_gen: v6e
topology: v6e:2x2x1
jax: 0.10.0
libtpu: 0.0.40
codegen_flags: <defaults>
</compile_context>

<pallas_src>
import functools

import jax
import jax.numpy as jnp
from jax import lax
from jax.experimental import pallas as pl
from jax.experimental.pallas import tpu as pltpu

_LANE = 128      # vreg lane width
_SUBLANE = 8     # vreg sublane count (f32)
_BN_EPS = 1e-5   # PyTorch BatchNorm1d default


def _round_up(x, m):
    return (x + m - 1) // m * m


def _pick_tile(dim, preferred):
    """Largest preferred tile that evenly divides a lane-padded dim."""
    for t in preferred:
        if dim % t == 0:
            return t
    return _LANE


# --------------------------------------------------------------------------
# Kernel: one (feature-tile j, K-tile k) grid step of  y = BN(ReLU(x @ W + b))
# --------------------------------------------------------------------------
def _linear_act_bn_kernel(x_ref, w_ref, b_ref, g_ref, bt_ref, o_ref, acc_ref,
                          *, n_valid, use_activation, use_batch_norm, eps):
    k = pl.program_id(1)

    @pl.when(k == 0)
    def _():
        acc_ref[...] = jnp.zeros_like(acc_ref)

    # MXU matmul with f32 accumulation (inputs may be f32 or bf16).
    acc_ref[...] += jnp.dot(x_ref[...], w_ref[...],
                            preferred_element_type=jnp.float32)

    @pl.when(k == pl.num_programs(1) - 1)
    def _():
        y = acc_ref[...] + b_ref[...].astype(jnp.float32)

        if use_activation:
            y = jnp.maximum(y, 0.0)                       # ReLU

        if use_batch_norm:
            # Batch statistics over axis 0, *valid rows only*: the batch axis
            # is padded to a sublane multiple and padded rows see ReLU(b) != 0,
            # so they must be masked out of the reduction. All BN math in f32
            # (v5e VPU/EUP have no bf16).
            row_ids = lax.broadcasted_iota(jnp.int32, y.shape, 0)
            valid = row_ids < n_valid
            inv_n = 1.0 / float(n_valid)
            y_masked = jnp.where(valid, y, 0.0)
            mean = jnp.sum(y_masked, axis=0, keepdims=True) * inv_n
            centered = jnp.where(valid, y - mean, 0.0)
            var = jnp.sum(centered * centered, axis=0, keepdims=True) * inv_n
            inv_std = lax.rsqrt(var + eps)
            y = (y - mean) * inv_std * g_ref[...].astype(jnp.float32) \
                + bt_ref[...].astype(jnp.float32)

        o_ref[...] = y.astype(o_ref.dtype)


# --------------------------------------------------------------------------
# One Linear_trans layer on lane-padded operands.
# --------------------------------------------------------------------------
def linear_trans_pallas(x_padded, wT_padded, b_padded, g_padded, bt_padded, *,
                        n_valid, use_activation=True, use_batch_norm=True,
                        eps=_BN_EPS):
    """x_padded: (Np, Kp)  — Np multiple of 8, Kp multiple of 128
       wT_padded: (Kp, Mp) — pre-transposed, pre-padded weight
       b/g/bt:    (1, Mp)  — f32
       returns:   (Np, Mp) in x_padded.dtype"""
    n_pad, k_pad = x_padded.shape
    m_pad = wT_padded.shape[1]

    # MXU-aligned tiles (256 preferred for v6e/v7x geometry, 128 fallback).
    tn = _pick_tile(m_pad, (256, 128))
    tk = _pick_tile(k_pad, (512, 256, 128))
    grid = (m_pad // tn, k_pad // tk)

    # VMEM budget: double-buffered inputs/outputs + f32 accumulator, 2x headroom,
    # clamped to v7x's 64 MiB physical VMEM.
    itm = x_padded.dtype.itemsize
    est = (2 * (n_pad * tk + tk * tn) * itm      # x, W^T tiles (double-buffered)
           + 2 * n_pad * tn * itm                # output tile  (double-buffered)
           + n_pad * tn * 4                      # f32 accumulator scratch
           + 3 * 2 * tn * 4)                     # bias / gamma / beta tiles
    vmem_limit = int(min(max(2 * est, 16 * 2**20), 64 * 2**20))

    kernel = functools.partial(
        _linear_act_bn_kernel, n_valid=n_valid,
        use_activation=use_activation, use_batch_norm=use_batch_norm, eps=eps)

    return pl.pallas_call(
        kernel,
        out_shape=jax.ShapeDtypeStruct((n_pad, m_pad), x_padded.dtype),
        grid_spec=pltpu.PrefetchScalarGridSpec(
            num_scalar_prefetch=0,
            grid=grid,                                   # (feature tiles, K tiles)
            in_specs=[
                pl.BlockSpec((n_pad, tk), lambda j, k: (0, k)),   # x
                pl.BlockSpec((tk, tn),    lambda j, k: (k, j)),   # W^T
                pl.BlockSpec((1, tn),     lambda j, k: (0, j)),   # bias
                pl.BlockSpec((1, tn),     lambda j, k: (0, j)),   # gamma
                pl.BlockSpec((1, tn),     lambda j, k: (0, j)),   # beta
            ],
            out_specs=pl.BlockSpec((n_pad, tn), lambda j, k: (0, j)),
            scratch_shapes=[pltpu.VMEM((n_pad, tn), jnp.float32)],
        ),
        compiler_params=pltpu.CompilerParams(
            dimension_semantics=("parallel", "arbitrary"),
            vmem_limit_bytes=vmem_limit,
        ),
    )(x_padded, wT_padded, b_padded, g_padded, bt_padded)


# --------------------------------------------------------------------------
# Parameter init (PyTorch layout, for the reference) and one-time packing.
# --------------------------------------------------------------------------
def init_mlp_params(key, in_dim, out_dim, hidden_layer_dims):
    """nn.Linear-style init: W ~ U(-1/sqrt(fan_in), 1/sqrt(fan_in)); BN affine = (1, 0)."""
    layer_dims = [in_dim] + list(hidden_layer_dims) + [out_dim]
    params = []
    for i in range(len(layer_dims) - 1):
        d_in, d_out = layer_dims[i], layer_dims[i + 1]
        key, kw, kb = jax.random.split(key, 3)
        bound = 1.0 / jnp.sqrt(jnp.float32(d_in))
        w = jax.random.uniform(kw, (d_out, d_in), jnp.float32, -bound, bound)
        b = jax.random.uniform(kb, (d_out,), jnp.float32, -bound, bound)
        gamma = jnp.ones((d_out,), jnp.float32)
        beta = jnp.zeros((d_out,), jnp.float32)
        params.append((w, b, gamma, beta))
    return params


def pack_params_for_pallas(params, compute_dtype=jnp.float32):
    """One-time packing: pre-transpose W to (in_dim, out_dim) and zero-pad the
    feature axes to lane (128) multiples so every forward call sees aligned,
    lane-dense tiles with no per-call transpose/pad HBM traffic."""
    packed = []
    for (w, b, gamma, beta) in params:
        out_d, in_d = w.shape
        kp = _round_up(in_d, _LANE)
        mp = _round_up(out_d, _LANE)
        wT = jnp.zeros((kp, mp), compute_dtype).at[:in_d, :out_d].set(
            jnp.transpose(w).astype(compute_dtype))
        bp = jnp.zeros((1, mp), jnp.float32).at[0, :out_d].set(b)
        gp = jnp.zeros((1, mp), jnp.float32).at[0, :out_d].set(gamma)
        btp = jnp.zeros((1, mp), jnp.float32).at[0, :out_d].set(beta)
        packed.append((wT, bp, gp, btp, out_d))
    return packed


def mlp_forward_pallas(x, packed_params, *, batch_norm=True,
                       compute_dtype=jnp.float32):
    """Forward pass of MLP. Activations stay in the lane-padded layout across
    the whole stack (pad once, slice once at the end)."""
    n, in_dim = x.shape
    k_pad0 = packed_params[0][0].shape[0]
    assert in_dim <= k_pad0, (x.shape, k_pad0)

    n_pad = _round_up(max(n, _SUBLANE), _SUBLANE)
    xp = jnp.zeros((n_pad, k_pad0), compute_dtype).at[:n, :in_dim].set(
        x.astype(compute_dtype))

    for (wT, b, g, bt, _out_d) in packed_params:
        xp = linear_trans_pallas(xp, wT, b, g, bt, n_valid=n,
                                 use_activation=True,
                                 use_batch_norm=batch_norm)

    out_d = packed_params[-1][4]
    return xp[:n, :out_d].astype(x.dtype)


# --------------------------------------------------------------------------
# Pure-JAX reference (PyTorch training-mode semantics).
# --------------------------------------------------------------------------
def mlp_reference(x, params, *, batch_norm=True, eps=_BN_EPS):
    for (w, b, gamma, beta) in params:
        y = x @ w.T + b
        y = jnp.maximum(y, 0.0)                              # ReLU
        if batch_norm:
            mean = jnp.mean(y, axis=0, keepdims=True)
            var = jnp.mean((y - mean) ** 2, axis=0, keepdims=True)
            y = (y - mean) * lax.rsqrt(var + eps) * gamma + beta
        x = y
    return x


if __name__ == "__main__":
    key = jax.random.PRNGKey(0)
    key, kx = jax.random.split(key)

    # Small shapes consistent with the module's forward (activation = ReLU).
    batch = 8
    in_dim = 16
    hidden_layer_dims = [32, 32]
    out_dim = 8

    x = jax.random.normal(kx, (batch, in_dim), jnp.float32)
    params = init_mlp_params(key, in_dim, out_dim, hidden_layer_dims)
    # f32 compute for a tight match with the f32 reference; at real layer
    # widths use compute_dtype=jnp.bfloat16 for MXU peak (f32 accumulation and
    # f32 BN math are preserved inside the kernel).
    packed = pack_params_for_pallas(params, compute_dtype=jnp.float32)

    out = mlp_forward_pallas(x, packed, batch_norm=True)
    out = jax.block_until_ready(out)

    ref = mlp_reference(x, params, batch_norm=True)
    assert out.shape == (batch, out_dim), out.shape
    assert jnp.allclose(out, ref, atol=1e-4, rtol=1e-4), "mismatch vs JAX reference"

    print("KERNEL_OK")
</pallas_src>

<mosaic_0001>
module attributes {stable_mosaic.version = 11 : i64} {
  func.func @_linear_act_bn_kernel(%arg0: i32, %arg1: i32, %arg2: memref<8x128xf32, #tpu.memory_space<vmem>>, %arg3: memref<128x128xf32, #tpu.memory_space<vmem>>, %arg4: memref<1x128xf32, #tpu.memory_space<vmem>>, %arg5: memref<1x128xf32, #tpu.memory_space<vmem>>, %arg6: memref<1x128xf32, #tpu.memory_space<vmem>>, %arg7: memref<8x128xf32, #tpu.memory_space<vmem>>, %arg8: memref<8x128xf32, #tpu.memory_space<vmem>>) attributes {dimension_semantics = [#tpu.dimension_semantics<parallel>, #tpu.dimension_semantics<arbitrary>], iteration_bounds = array<i64: 1, 1>, scalar_prefetch = 0 : i64, scratch_operands = 1 : i64, tpu.core_type = #tpu.core_type<tc>, window_params = [{transform_indices = @transform_0, window_bounds = array<i64: 8, 128>}, {transform_indices = @transform_1, window_bounds = array<i64: 128, 128>}, {transform_indices = @transform_2, window_bounds = array<i64: 1, 128>}, {transform_indices = @transform_3, window_bounds = array<i64: 1, 128>}, {transform_indices = @transform_4, window_bounds = array<i64: 1, 128>}, {transform_indices = @transform_5, window_bounds = array<i64: 8, 128>}]} {
    %c0_i32 = arith.constant 0 : i32
    %0 = arith.cmpi eq, %arg1, %c0_i32 : i32
    %1 = arith.extui %0 : i1 to i32
    %c0_i32_0 = arith.constant 0 : i32
    %2 = arith.cmpi ne, %1, %c0_i32_0 : i32
    scf.if %2 {
      %cst_10 = arith.constant 0.000000e+00 : f32
      %12 = vector.broadcast %cst_10 : f32 to vector<8x128xf32>
      %c0_11 = arith.constant 0 : index
      %c0_12 = arith.constant 0 : index
      %13 = vector.load %arg8[%c0_11, %c0_12] : memref<8x128xf32, #tpu.memory_space<vmem>>, vector<8x128xf32>
      tpu.vector_store %arg8[%c0_11, %c0_12], %12 {strides = array<i32>} : memref<8x128xf32, #tpu.memory_space<vmem>>, vector<8x128xf32>,
    } else {
    }
    %c0 = arith.constant 0 : index
    %c0_1 = arith.constant 0 : index
    %3 = vector.load %arg8[%c0, %c0_1] : memref<8x128xf32, #tpu.memory_space<vmem>>, vector<8x128xf32>
    %c0_2 = arith.constant 0 : index
    %c0_3 = arith.constant 0 : index
    %4 = vector.load %arg2[%c0_2, %c0_3] : memref<8x128xf32, #tpu.memory_space<vmem>>, vector<8x128xf32>
    %c0_4 = arith.constant 0 : index
    %c0_5 = arith.constant 0 : index
    %5 = vector.load %arg3[%c0_4, %c0_5] : memref<128x128xf32, #tpu.memory_space<vmem>>, vector<128x128xf32>
    %cst = arith.constant dense<0.000000e+00> : vector<8x128xf32>
    %6 = tpu.matmul %4, %5, %cst {dimension_numbers = #tpu.dot_dimension_numbers<[1], [0], [0], [1], [0, 0, 1, 1], [], []>} : vector<8x128xf32>, vector<128x128xf32>, vector<8x128xf32> -> vector<8x128xf32>
    %7 = arith.addf %3, %6 : vector<8x128xf32>
    %c0_6 = arith.constant 0 : index
    %c0_7 = arith.constant 0 : index
    %8 = vector.load %arg8[%c0_6, %c0_7] : memref<8x128xf32, #tpu.memory_space<vmem>>, vector<8x128xf32>
    tpu.vector_store %arg8[%c0_6, %c0_7], %7 {strides = array<i32>} : memref<8x128xf32, #tpu.memory_space<vmem>>, vector<8x128xf32>,
    %c0_i32_8 = arith.constant 0 : i32
    %9 = arith.cmpi eq, %arg1, %c0_i32_8 : i32
    %10 = arith.extui %9 : i1 to i32
    %c0_i32_9 = arith.constant 0 : i32
    %11 = arith.cmpi ne, %10, %c0_i32_9 : i32
    scf.if %11 {
      %c0_10 = arith.constant 0 : index
      %c0_11 = arith.constant 0 : index
      %12 = vector.load %arg8[%c0_10, %c0_11] : memref<8x128xf32, #tpu.memory_space<vmem>>, vector<8x128xf32>
      %c0_12 = arith.constant 0 : index
      %c0_13 = arith.constant 0 : index
      %13 = vector.load %arg4[%c0_12, %c0_13] : memref<1x128xf32, #tpu.memory_space<vmem>>, vector<1x128xf32>
      %14 = vector.broadcast %13 : vector<1x128xf32> to vector<8x128xf32>
      %15 = arith.addf %12, %14 : vector<8x128xf32>
      %cst_14 = arith.constant 0.000000e+00 : f32
      %16 = vector.broadcast %cst_14 : f32 to vector<8x128xf32>
      %17 = arith.maximumf %15, %16 : vector<8x128xf32>
      %18 = tpu.iota {dimensions = array<i32: 0>} : vector<8x128xi32>
      %c8_i32 = arith.constant 8 : i32
      %19 = vector.broadcast %c8_i32 : i32 to vector<8x128xi32>
      %20 = arith.cmpi slt, %18, %19 : vector<8x128xi32>
      %cst_15 = arith.constant 0.000000e+00 : f32
      %21 = vector.broadcast %cst_15 : f32 to vector<8x128xf32>
      %22 = arith.select %20, %17, %21 : vector<8x128xi1>, vector<8x128xf32>
      %cst_16 = arith.constant dense<0.000000e+00> : vector<128xf32>
      %23 = vector.multi_reduction <add>, %22, %cst_16 [0] : vector<8x128xf32> to vector<128xf32>
      %24 = vector.shape_cast %23 : vector<128xf32> to vector<1x128xf32>
      %cst_17 = arith.constant 1.250000e-01 : f32
      %25 = vector.broadcast %cst_17 : f32 to vector<1x128xf32>
      %26 = arith.mulf %24, %25 : vector<1x128xf32>
      %27 = vector.broadcast %26 : vector<1x128xf32> to vector<8x128xf32>
      %28 = arith.subf %17, %27 : vector<8x128xf32>
      %cst_18 = arith.constant 0.000000e+00 : f32
      %29 = vector.broadcast %cst_18 : f32 to vector<8x128xf32>
      %30 = arith.select %20, %28, %29 : vector<8x128xi1>, vector<8x128xf32>
      %31 = arith.mulf %30, %30 : vector<8x128xf32>
      %cst_19 = arith.constant dense<0.000000e+00> : vector<128xf32>
      %32 = vector.multi_reduction <add>, %31, %cst_19 [0] : vector<8x128xf32> to vector<128xf32>
      %33 = vector.shape_cast %32 : vector<128xf32> to vector<1x128xf32>
      %cst_20 = arith.constant 1.250000e-01 : f32
      %34 = vector.broadcast %cst_20 : f32 to vector<1x128xf32>
      %35 = arith.mulf %33, %34 : vector<1x128xf32>
      %cst_21 = arith.constant 9.99999974E-6 : f32
      %36 = vector.broadcast %cst_21 : f32 to vector<1x128xf32>
      %37 = arith.addf %35, %36 : vector<1x128xf32>
      %38 = math.rsqrt %37 : vector<1x128xf32>
      %39 = vector.broadcast %26 : vector<1x128xf32> to vector<8x128xf32>
      %40 = arith.subf %17, %39 : vector<8x128xf32>
      %41 = vector.broadcast %38 : vector<1x128xf32> to vector<8x128xf32>
      %42 = arith.mulf %40, %41 : vector<8x128xf32>
      %c0_22 = arith.constant 0 : index
      %c0_23 = arith.constant 0 : index
      %43 = vector.load %arg5[%c0_22, %c0_23] : memref<1x128xf32, #tpu.memory_space<vmem>>, vector<1x128xf32>
      %44 = vector.broadcast %43 : vector<1x128xf32> to vector<8x128xf32>
      %45 = arith.mulf %42, %44 : vector<8x128xf32>
      %c0_24 = arith.constant 0 : index
      %c0_25 = arith.constant 0 : index
      %46 = vector.load %arg6[%c0_24, %c0_25] : memref<1x128xf32, #tpu.memory_space<vmem>>, vector<1x128xf32>
      %47 = vector.broadcast %46 : vector<1x128xf32> to vector<8x128xf32>
      %48 = arith.addf %45, %47 : vector<8x128xf32>
      %c0_26 = arith.constant 0 : index
      %c0_27 = arith.constant 0 : index
      %49 = vector.load %arg7[%c0_26, %c0_27] : memref<8x128xf32, #tpu.memory_space<vmem>>, vector<8x128xf32>
      tpu.vector_store %arg7[%c0_26, %c0_27], %48 {strides = array<i32>} : memref<8x128xf32, #tpu.memory_space<vmem>>, vector<8x128xf32>,
    } else {
    }
    return
  }
  func.func @transform_0(%arg0: i32, %arg1: i32) -> (i32, i32) {
    %c0_i32 = arith.constant 0 : i32
    %c0_i32_0 = arith.constant 0 : i32
    return %c0_i32, %arg1 : i32, i32
  }
  func.func @transform_1(%arg0: i32, %arg1: i32) -> (i32, i32) {
    %c0_i32 = arith.constant 0 : i32
    return %arg1, %arg0 : i32, i32
  }
  func.func @transform_2(%arg0: i32, %arg1: i32) -> (i32, i32) {
    %c0_i32 = arith.constant 0 : i32
    %c0_i32_0 = arith.constant 0 : i32
    return %c0_i32, %arg0 : i32, i32
  }
  func.func @transform_3(%arg0: i32, %arg1: i32) -> (i32, i32) {
    %c0_i32 = arith.constant 0 : i32
    %c0_i32_0 = arith.constant 0 : i32
    return %c0_i32, %arg0 : i32, i32
  }
  func.func @transform_4(%arg0: i32, %arg1: i32) -> (i32, i32) {
    %c0_i32 = arith.constant 0 : i32
    %c0_i32_0 = arith.constant 0 : i32
    return %c0_i32, %arg0 : i32, i32
  }
  func.func @transform_5(%arg0: i32, %arg1: i32) -> (i32, i32) {
    %c0_i32 = arith.constant 0 : i32
    %c0_i32_0 = arith.constant 0 : i32
    return %c0_i32, %arg0 : i32, i32
  }
}

</mosaic_0001>

<llo_original>
// kernel: tpu_custom_call.1
$region0: #{tpu_custom_call.1}
  #allocation0 [shape = 'u32[]', space=smem, size = 0x4, offset = 0x4, fixed_abs, tag = 'smem constant byte address 0x4 - core index']
  #allocation1 [shape = 'u32[144,128]{1,0:T(1,128)}', space=vmem, size = 0x12000, scoped, tag = 'internal scratch']
  #allocation2 [shape = 'f32[8,128]{1,0:T(8,128)}', space=vmem, size = 0x1000, scoped, tag = 'scratch operand']
  %s0 = inlined_call_operand.hbm [shape: f32[8,128], index: 0, kind: input, shape index: {}]
  %s1 = inlined_call_operand.hbm [shape: f32[128,128], index: 1, kind: input, shape index: {}]
  %s2 = inlined_call_operand.vmem [shape: f32[1,128], index: 2, kind: input, shape index: {}]
  %s3 = inlined_call_operand.vmem [shape: f32[1,128], index: 3, kind: input, shape index: {}]
  %s4 = inlined_call_operand.vmem [shape: f32[1,128], index: 4, kind: input, shape index: {}]
  %s5 = inlined_call_operand.hbm [shape: f32[8,128], index: 5, kind: output, shape index: {}]
  %s6 = sld [smem:[#allocation0]]
  $region46: #{tpu_custom_call.1} parent=0
    _
  %s8 = ssub.s32 1, %s6
  %s9 = scalar_select 0, %s8, %s6
  $region1: #{tpu_custom_call.1} parent=0
    #allocation3 [shape = 'u8[4096]{0}', space=vmem, size = 0x1000, scoped, tag = 'input window, operand 0, single buffered']
    #allocation4 [shape = 's32[1]{0}', space=sflag, size = 0x4, scoped, tag = 'scoped memory for tpu_custom_call.1']
    #allocation5 [shape = 's32[1]{0}', space=sflag, size = 0x4, scoped, tag = 'scoped memory for tpu_custom_call.1']
    #allocation6 [shape = 'u8[65536]{0}', space=vmem, size = 0x10000, scoped, tag = 'input window, operand 1, single buffered']
    #allocation7 [shape = 's32[1]{0}', space=sflag, size = 0x4, scoped, tag = 'scoped memory for tpu_custom_call.1']
    #allocation8 [shape = 'u8[4096]{0}', space=vmem, size = 0x1000, scoped, tag = 'output window, operand 0, single buffered']
    %10 = vsyncpa [#allocation4], 0
    %11 = vsyncpa [#allocation7], 0
    %12 = vsyncpa [#allocation5], 0
    // Predicated region
    $region2: #{tpu_custom_call.1} parent=1 // pred_check
      _
    $region3: #{tpu_custom_call.1} parent=1 // pred_check_branch
      %14 = sbr.rel (0) target = $region5
    $region4: #{tpu_custom_call.1} parent=1 // pred_region
      %s16 = ssub.s32 128, 128
      %17 = vsyncadd [#allocation4], %s16
      %s19 = sshll.u32 [#allocation3], 4
      %s20 = int_to_ptr.vmem [resolvable:$true] %s19
      %22 = dma.hbm_to_vmem [thread:$0]  %s0, 128, %s20, [#allocation4]
    $region5: #{tpu_custom_call.1} parent=1 // pred_fallthru
      _
    // Predicated region
    $region6: #{tpu_custom_call.1} parent=1 // pred_check
      _
    $region7: #{tpu_custom_call.1} parent=1 // pred_check_branch
      %24 = sbr.rel (0) target = $region9
    $region8: #{tpu_custom_call.1} parent=1 // pred_region
      %s26 = ssub.s32 2048, 2048
      %27 = vsyncadd [#allocation7], %s26
      %s28 = sshll.u32 [#allocation6], 4
      %s29 = int_to_ptr.vmem [resolvable:$true] %s28
      %34 = dma.hbm_to_vmem [thread:$0]  %s1, 2048, %s29, [#allocation7], 128, 128, 8
    $region9: #{tpu_custom_call.1} parent=1 // pred_fallthru
      _
    // Predicated region
    $region10: #{tpu_custom_call.1} parent=1 // pred_check
      _
    $region11: #{tpu_custom_call.1} parent=1 // pred_check_branch
      %36 = sbr.rel (0) target = $region13
    $region12: #{tpu_custom_call.1} parent=1 // pred_region
      _
    $region13: #{tpu_custom_call.1} parent=1 // pred_fallthru
      _
    // Predicated region
    $region14: #{tpu_custom_call.1} parent=1 // pred_check
      _
    $region15: #{tpu_custom_call.1} parent=1 // pred_check_branch
      %38 = sbr.rel (0) target = $region17
    $region16: #{tpu_custom_call.1} parent=1 // pred_region
      _
    $region17: #{tpu_custom_call.1} parent=1 // pred_fallthru
      _
    // Predicated region
    $region18: #{tpu_custom_call.1} parent=1 // pred_check
      _
    $region19: #{tpu_custom_call.1} parent=1 // pred_check_branch
      %40 = sbr.rel (0) target = $region21
    $region20: #{tpu_custom_call.1} parent=1 // pred_region
      _
    $region21: #{tpu_custom_call.1} parent=1 // pred_fallthru
      _
    // Predicated region
    $region22: #{tpu_custom_call.1} parent=1 // pred_check
      _
    $region23: #{tpu_custom_call.1} parent=1 // pred_check_branch
      %42 = sbr.rel (0) target = $region25
    $region24: #{tpu_custom_call.1} parent=1 // pred_region
      %43 = dma.done [#allocation4], 128
    $region25: #{tpu_custom_call.1} parent=1 // pred_fallthru
      _
    // Predicated region
    $region26: #{tpu_custom_call.1} parent=1 // pred_check
      _
    $region27: #{tpu_custom_call.1} parent=1 // pred_check_branch
      %45 = sbr.rel (0) target = $region29
    $region28: #{tpu_custom_call.1} parent=1 // pred_region
      %46 = dma.done [#allocation7], 2048
    $region29: #{tpu_custom_call.1} parent=1 // pred_fallthru
      _
    %p47 = scmp.eq.s32.totalorder 0, 0
    // Predicated region
    $region30: #{tpu_custom_call.1} parent=1 // pred_check
      %p48 = pneg %p47
    $region31: #{tpu_custom_call.1} parent=1 // pred_check_branch
      %50 = sbr.rel (%p48) target = $region33
    $region32: #{tpu_custom_call.1} parent=1 // pred_region
      %51 = vst [vmem:[#allocation2] sm:$0xff] 0.0
    $region33: #{tpu_custom_call.1} parent=1 // pred_fallthru
      _
    %v52 = vld [vmem:[#allocation2] sm:$0xff]
    %v53 = vld [vmem:[#allocation3] sm:$0xff]
    %v54 = vld [vmem:[#allocation6] sm:$0xff]
    %v55 = vld [vmem:[#allocation6 + $0x8] sm:$0xff]
    %v56 = vld [vmem:[#allocation6 + $0x10] sm:$0xff]
    %v57 = vld [vmem:[#allocation6 + $0x18] sm:$0xff]
    %v58 = vld [vmem:[#allocation6 + $0x20] sm:$0xff]
    %v59 = vld [vmem:[#allocation6 + $0x28] sm:$0xff]
    %v60 = vld [vmem:[#allocation6 + $0x30] sm:$0xff]
    %v61 = vld [vmem:[#allocation6 + $0x38] sm:$0xff]
    %v62 = vld [vmem:[#allocation6 + $0x40] sm:$0xff]
    %v63 = vld [vmem:[#allocation6 + $0x48] sm:$0xff]
    %v64 = vld [vmem:[#allocation6 + $0x50] sm:$0xff]
    %v65 = vld [vmem:[#allocation6 + $0x58] sm:$0xff]
    %v66 = vld [vmem:[#allocation6 + $0x60] sm:$0xff]
    %v67 = vld [vmem:[#allocation6 + $0x68] sm:$0xff]
    %v68 = vld [vmem:[#allocation6 + $0x70] sm:$0xff]
    %v69 = vld [vmem:[#allocation6 + $0x78] sm:$0xff]
    %70 = vmatprep.subr.mxu0 0.0
    %71 = vmatpush1.msra.mxu0 %v69
    %72 = vmatprep.subr.mxu0 0.0
    %73 = vmatpush1.msra.mxu0 %v68
    %74 = vmatprep.subr.mxu0 0.0
    %75 = vmatpush1.msra.mxu0 %v67
    %76 = vmatprep.subr.mxu0 0.0
    %77 = vmatpush1.msra.mxu0 %v66
    %78 = vmatprep.subr.mxu0 0.0
    %79 = vmatpush1.msra.mxu0 %v65
    %80 = vmatprep.subr.mxu0 0.0
    %81 = vmatpush1.msra.mxu0 %v64
    %82 = vmatprep.subr.mxu0 0.0
    %83 = vmatpush1.msra.mxu0 %v63
    %84 = vmatprep.subr.mxu0 0.0
    %85 = vmatpush1.msra.mxu0 %v62
    %86 = vmatprep.subr.mxu0 0.0
    %87 = vmatpush1.msra.mxu0 %v61
    %88 = vmatprep.subr.mxu0 0.0
    %89 = vmatpush1.msra.mxu0 %v60
    %90 = vmatprep.subr.mxu0 0.0
    %91 = vmatpush1.msra.mxu0 %v59
    %92 = vmatprep.subr.mxu0 0.0
    %93 = vmatpush1.msra.mxu0 %v58
    %94 = vmatprep.subr.mxu0 0.0
    %95 = vmatpush1.msra.mxu0 %v57
    %96 = vmatprep.subr.mxu0 0.0
    %97 = vmatpush1.msra.mxu0 %v56
    %98 = vmatprep.subr.mxu0 0.0
    %99 = vmatpush1.msra.mxu0 %v55
    %100 = vmatprep.subr.mxu0 0.0
    %101 = vmatpush1.msra.mxu0 %v54
    %102 = vmatprep.subr.mxu0 0.0
    %103 = vmatpush2.msra.mxu0 0.0
    %104 = vmatprep.subr.mxu0 0.0
    %105 = vmatpush2.msra.mxu0 0.0
    %106 = vmatprep.subr.mxu0 0.0
    %107 = vmatpush2.msra.mxu0 0.0
    %108 = vmatprep.subr.mxu0 0.0
    %109 = vmatpush2.msra.mxu0 0.0
    %110 = vmatprep.subr.mxu0 0.0
    %111 = vmatpush2.msra.mxu0 0.0
    %112 = vmatprep.subr.mxu0 0.0
    %113 = vmatpush2.msra.mxu0 0.0
    %114 = vmatprep.subr.mxu0 0.0
    %115 = vmatpush2.msra.mxu0 0.0
    %116 = vmatprep.subr.mxu0 0.0
    %117 = vmatpush2.msra.mxu0 0.0
    %118 = vmatprep.subr.mxu0 0.0
    %119 = vmatpush2.msra.mxu0 0.0
    %120 = vmatprep.subr.mxu0 0.0
    %121 = vmatpush2.msra.mxu0 0.0
    %122 = vmatprep.subr.mxu0 0.0
    %123 = vmatpush2.msra.mxu0 0.0
    %124 = vmatprep.subr.mxu0 0.0
    %125 = vmatpush2.msra.mxu0 0.0
    %126 = vmatprep.subr.mxu0 0.0
    %127 = vmatpush2.msra.mxu0 0.0
    %128 = vmatprep.subr.mxu0 0.0
    %129 = vmatpush2.msra.mxu0 0.0
    %130 = vmatprep.subr.mxu0 0.0
    %131 = vmatpush2.msra.mxu0 0.0
    %132 = vmatprep.subr.mxu0 0.0
    %133 = vmatpush2.msra.mxu0 0.0
    %134 = vmatprep.mubr.f32.mxu0 0.0
    %135 = vmatmul.mubr.f32.gmra.mxu0 %v53
    %v136 = vpop.f32.mrf.mxu0
    %v137 = vadd.f32 0.0, %v136
    %v138 = vpop.f32.mrf.mxu0
    %139 = vdwg.mxu0
    %v140 = vadd.f32 %v52, %v137
    %141 = vst [vmem:[#allocation2] sm:$0xff] %v140
    // Predicated region
    $region34: #{tpu_custom_call.1} parent=1 // pred_check
      %p142 = pneg %p47
    $region35: #{tpu_custom_call.1} parent=1 // pred_check_branch
      %144 = sbr.rel (%p142) target = $region37
    $region36: #{tpu_custom_call.1} parent=1 // pred_region
      %v145 = vld [vmem:[#allocation2] sm:$0xff]
      %v146 = vld [vmem:[%s2] sm:$0x1]
      %v148 = vlaneseq
      %v149 = vshrl.u32 %v148, 7
      %v150 = vsub.s32 0, %v149
      %v151 = vrot.slane %v146, %v150
      %v153 = vadd.f32 %v145, %v151
      %v154 = vmax.f32 %v153, 0.0
      %v155 = vlaneseq
      %v156 = vshrl.u32 %v155, 7
      %vm157 = vcmp.lt.s32.totalorder %v156, 8
      %v158 = vsel %vm157, %v154, 0.0
      %v159 = vrot.slane %v158, 4
      %v160 = vadd.f32 %v158, %v159
      %v161 = vrot.slane %v160, 2
      %v162 = vadd.f32 %v160, %v161
      %v163 = vrot.slane %v162, 1
      %v164 = vadd.f32 %v162, %v163
      %v165 = vmul.f32 %v164, 0.125
      %v166 = vsub.f32 %v154, %v165
      %v167 = vsel %vm157, %v166, 0.0
      %v168 = vmul.f32 %v167, %v167
      %v169 = vrot.slane %v168, 4
      %v170 = vadd.f32 %v168, %v169
      %v171 = vrot.slane %v170, 2
      %v172 = vadd.f32 %v170, %v171
      %v173 = vrot.slane %v172, 1
      %v174 = vadd.f32 %v172, %v173
      %v175 = vmul.f32 %v174, 0.125
      %v176 = vadd.f32 %v175, 1e-05
      %v177 = vrsqrt.pop %v176
      %v178 = vmul.f32 %v166, %v177
      %v179 = vld [vmem:[%s3] sm:$0x1]
      %v181 = vlaneseq
      %v182 = vshrl.u32 %v181, 7
      %v183 = vsub.s32 0, %v182
      %v184 = vrot.slane %v179, %v183
      %v186 = vmul.f32 %v178, %v184
      %v187 = vld [vmem:[%s4] sm:$0x1]
      %v189 = vlaneseq
      %v190 = vshrl.u32 %v189, 7
      %v191 = vsub.s32 0, %v190
      %v192 = vrot.slane %v187, %v191
      %v194 = vadd.f32 %v186, %v192
      %195 = vst [vmem:[#allocation8] sm:$0xff] %v194
    $region37: #{tpu_custom_call.1} parent=1 // pred_fallthru
      _
    // Predicated region
    $region38: #{tpu_custom_call.1} parent=1 // pred_check
      _
    $region39: #{tpu_custom_call.1} parent=1 // pred_check_branch
      %197 = sbr.rel (0) target = $region41
    $region40: #{tpu_custom_call.1} parent=1 // pred_region
      %s199 = ssub.s32 128, 128
      %200 = vsyncadd [#allocation5], %s199
      %s202 = sshll.u32 [#allocation8], 4
      %s203 = int_to_ptr.vmem [resolvable:$true] %s202
      %205 = dma.vmem_to_hbm [thread:$0]  %s203, 128, %s5, [#allocation5]
    $region41: #{tpu_custom_call.1} parent=1 // pred_fallthru
      _
    // Predicated region
    $region42: #{tpu_custom_call.1} parent=1 // pred_check
      _
    $region43: #{tpu_custom_call.1} parent=1 // pred_check_branch
      %207 = sbr.rel (0) target = $region45
    $region44: #{tpu_custom_call.1} parent=1 // pred_region
      %208 = dma.done [#allocation5], 128
    $region45: #{tpu_custom_call.1} parent=1 // pred_fallthru
      _
    %209 = vsyncpa [#allocation4], 1
    %210 = vsyncpa [#allocation7], 1
    %211 = vsyncpa [#allocation5], 1

</llo_original>
